<compile_context>
chip_gen: v6e
topology: v6e:2x2x1
jax: 0.10.0
libtpu: 0.0.40
codegen_flags: <defaults>
</compile_context>

<pallas_src>
import jax
import jax.numpy as jnp
from jax.experimental import pallas as pl
from jax.experimental.pallas import tpu as pltpu


def _fused_matmul_kernel(x_ref, w_ref, o_ref):
    # One MXU push per batch tile; the fused (64, 64) weight is VMEM-resident.
    o_ref[...] = jnp.dot(
        x_ref[...], w_ref[...], preferred_element_type=jnp.float32
    )


def m_forward(x, w1, w2, w3, *, block_b=1024):
    """Forward pass of M.

    x  : (B, 64)  float32 activations (PyTorch row-major layout).
    w1 : (32, 64) float32  -- linear1.weight   (out_features, in_features)
    w2 : (32, 32) float32  -- sub.linear.weight
    w3 : (64, 32) float32  -- linear2.weight
    """
    B, d_in = x.shape

    # Fold the bias-free, activation-free chain into one (64, 64) weight,
    # stored (in_features, out_features) so the kernel computes plain x @ W.
    w_fused = (w3 @ (w2 @ w1)).T
    d_out = w_fused.shape[1]

    # Pad batch to a sublane multiple (8 rows) so block shapes are tileable.
    b_pad = max(8, ((B + 7) // 8) * 8)
    tb = min(block_b, b_pad)
    # Make the padded batch a multiple of the batch tile.
    b_pad = ((b_pad + tb - 1) // tb) * tb
    if b_pad != B:
        x = jnp.pad(x, ((0, b_pad - B), (0, 0)))

    if b_pad == tb:
        # Small batch: gridless single-shot call, whole problem in one VMEM tile.
        out = pl.pallas_call(
            _fused_matmul_kernel,
            out_shape=jax.ShapeDtypeStruct((b_pad, d_out), jnp.float32),
        )(x, w_fused)
    else:
        # Large batch: tile over the batch axis; weight block is reused every
        # step (index_map -> (0, 0)), activations/outputs stream through VMEM.
        # "parallel" lets v7x shard grid steps across its two TensorCores.
        out = pl.pallas_call(
            _fused_matmul_kernel,
            out_shape=jax.ShapeDtypeStruct((b_pad, d_out), jnp.float32),
            grid=(b_pad // tb,),
            in_specs=[
                pl.BlockSpec((tb, d_in), lambda i: (i, 0)),
                pl.BlockSpec((d_in, d_out), lambda i: (0, 0)),
            ],
            out_specs=pl.BlockSpec((tb, d_out), lambda i: (i, 0)),
            compiler_params=pltpu.CompilerParams(
                dimension_semantics=("parallel",)
            ),
        )(x, w_fused)

    return out[:B]


if __name__ == "__main__":
    key = jax.random.PRNGKey(0)
    k_x, k_w1, k_w2, k_w3 = jax.random.split(key, 4)

    # Small batch consistent with the module (example uses batch=1; 8 aligns
    # to TPU sublanes without padding).
    B = 8
    x = jax.random.normal(k_x, (B, 64), dtype=jnp.float32)

    # PyTorch nn.Linear(bias=False) weights are (out_features, in_features).
    w1 = jax.random.uniform(k_w1, (32, 64), jnp.float32, -0.125, 0.125)  # linear1
    w2 = jax.random.uniform(k_w2, (32, 32), jnp.float32, -0.176, 0.176)  # sub.linear
    w3 = jax.random.uniform(k_w3, (64, 32), jnp.float32, -0.176, 0.176)  # linear2

    out = jax.block_until_ready(m_forward(x, w1, w2, w3))

    # Reference (same semantics as the PyTorch module: x @ W.T per layer).
    ref = ((x @ w1.T) @ w2.T) @ w3.T
    assert out.shape == (B, 64)
    assert jnp.allclose(out, ref, atol=1e-4, rtol=1e-4)

    # Also exercise the batch-tiled (grid) path with a tiny tile so the
    # multi-step pipeline + parallel-axis code path is covered.
    B2 = 24
    x2 = jax.random.normal(k_x, (B2, 64), dtype=jnp.float32)
    out2 = jax.block_until_ready(m_forward(x2, w1, w2, w3, block_b=8))
    ref2 = ((x2 @ w1.T) @ w2.T) @ w3.T
    assert out2.shape == (B2, 64)
    assert jnp.allclose(out2, ref2, atol=1e-4, rtol=1e-4)

    print("KERNEL_OK")
</pallas_src>

<mosaic_0001>
module attributes {stable_mosaic.version = 11 : i64} {
  func.func @_fused_matmul_kernel(%arg0: memref<8x64xf32, #tpu.memory_space<vmem>>, %arg1: memref<64x64xf32, #tpu.memory_space<vmem>>, %arg2: memref<8x64xf32, #tpu.memory_space<vmem>>) attributes {dimension_semantics = [], scalar_prefetch = 0 : i64, scratch_operands = 0 : i64, tpu.core_type = #tpu.core_type<tc>} {
    %c0 = arith.constant 0 : index
    %c0_0 = arith.constant 0 : index
    %0 = vector.load %arg0[%c0, %c0_0] : memref<8x64xf32, #tpu.memory_space<vmem>>, vector<8x64xf32>
    %c0_1 = arith.constant 0 : index
    %c0_2 = arith.constant 0 : index
    %1 = vector.load %arg1[%c0_1, %c0_2] : memref<64x64xf32, #tpu.memory_space<vmem>>, vector<64x64xf32>
    %cst = arith.constant dense<0.000000e+00> : vector<8x64xf32>
    %2 = tpu.matmul %0, %1, %cst {dimension_numbers = #tpu.dot_dimension_numbers<[1], [0], [0], [1], [0, 0, 1, 1], [], []>} : vector<8x64xf32>, vector<64x64xf32>, vector<8x64xf32> -> vector<8x64xf32>
    %c0_3 = arith.constant 0 : index
    %c0_4 = arith.constant 0 : index
    %3 = vector.load %arg2[%c0_3, %c0_4] : memref<8x64xf32, #tpu.memory_space<vmem>>, vector<8x64xf32>
    tpu.vector_store %arg2[%c0_3, %c0_4], %2 {strides = array<i32>} : memref<8x64xf32, #tpu.memory_space<vmem>>, vector<8x64xf32>,
    return
  }
}

</mosaic_0001>

<llo_original>
// kernel: tpu_custom_call.1
$region0: #{tpu_custom_call.1}
  #allocation0 [shape = 'u32[]', space=smem, size = 0x4, offset = 0x4, fixed_abs, tag = 'smem constant byte address 0x4 - core index']
  #allocation1 [shape = 'u32[144,128]{1,0:T(1,128)}', space=vmem, size = 0x12000, scoped, tag = 'internal scratch']
  %s0 = inlined_call_operand.hbm [shape: f32[8,64], index: 0, kind: input, shape index: {}]
  %s1 = inlined_call_operand.hbm [shape: f32[64,64], index: 1, kind: input, shape index: {}]
  %s2 = inlined_call_operand.hbm [shape: f32[8,64], index: 2, kind: output, shape index: {}]
  %s3 = sld [smem:[#allocation0]]
  $region26: #{tpu_custom_call.1} parent=0
    _
  %s5 = ssub.s32 1, %s3
  %s6 = scalar_select 0, %s5, %s3
  $region1: #{tpu_custom_call.1} parent=0
    #allocation2 [shape = 'u8[4096]{0}', space=vmem, size = 0x1000, scoped, tag = 'input window, operand 0, single buffered']
    #allocation3 [shape = 's32[1]{0}', space=sflag, size = 0x4, scoped, tag = 'scoped memory for tpu_custom_call.1']
    #allocation4 [shape = 's32[1]{0}', space=sflag, size = 0x4, scoped, tag = 'scoped memory for tpu_custom_call.1']
    #allocation5 [shape = 'u8[32768]{0}', space=vmem, size = 0x8000, scoped, tag = 'input window, operand 1, single buffered']
    #allocation6 [shape = 's32[1]{0}', space=sflag, size = 0x4, scoped, tag = 'scoped memory for tpu_custom_call.1']
    #allocation7 [shape = 'u8[4096]{0}', space=vmem, size = 0x1000, scoped, tag = 'output window, operand 0, single buffered']
    %7 = vsyncpa [#allocation3], 0
    %8 = vsyncpa [#allocation6], 0
    %9 = vsyncpa [#allocation4], 0
    // Predicated region
    $region2: #{tpu_custom_call.1} parent=1 // pred_check
      _
    $region3: #{tpu_custom_call.1} parent=1 // pred_check_branch
      %11 = sbr.rel (0) target = $region5
    $region4: #{tpu_custom_call.1} parent=1 // pred_region
      %s13 = ssub.s32 128, 128
      %14 = vsyncadd [#allocation3], %s13
      %s16 = sshll.u32 [#allocation2], 4
      %s17 = int_to_ptr.vmem [resolvable:$true] %s16
      %19 = dma.hbm_to_vmem [thread:$0]  %s0, 128, %s17, [#allocation3]
    $region5: #{tpu_custom_call.1} parent=1 // pred_fallthru
      _
    // Predicated region
    $region6: #{tpu_custom_call.1} parent=1 // pred_check
      _
    $region7: #{tpu_custom_call.1} parent=1 // pred_check_branch
      %21 = sbr.rel (0) target = $region9
    $region8: #{tpu_custom_call.1} parent=1 // pred_region
      %s23 = ssub.s32 1024, 1024
      %24 = vsyncadd [#allocation6], %s23
      %s25 = sshll.u32 [#allocation5], 4
      %s26 = int_to_ptr.vmem [resolvable:$true] %s25
      %31 = dma.hbm_to_vmem [thread:$0]  %s1, 1024, %s26, [#allocation6], 128, 128, 8
    $region9: #{tpu_custom_call.1} parent=1 // pred_fallthru
      _
    // Predicated region
    $region10: #{tpu_custom_call.1} parent=1 // pred_check
      _
    $region11: #{tpu_custom_call.1} parent=1 // pred_check_branch
      %33 = sbr.rel (0) target = $region13
    $region12: #{tpu_custom_call.1} parent=1 // pred_region
      %34 = dma.done [#allocation3], 128
    $region13: #{tpu_custom_call.1} parent=1 // pred_fallthru
      _
    // Predicated region
    $region14: #{tpu_custom_call.1} parent=1 // pred_check
      _
    $region15: #{tpu_custom_call.1} parent=1 // pred_check_branch
      %36 = sbr.rel (0) target = $region17
    $region16: #{tpu_custom_call.1} parent=1 // pred_region
      %37 = dma.done [#allocation6], 1024
    $region17: #{tpu_custom_call.1} parent=1 // pred_fallthru
      _
    %v38 = vld [vmem:[#allocation2] sm:$0xff]
    %v39 = vld [vmem:[#allocation5] sm:$0xff]
    %v40 = vld [vmem:[#allocation5 + $0x8] sm:$0xff]
    %v41 = vld [vmem:[#allocation5 + $0x10] sm:$0xff]
    %v42 = vld [vmem:[#allocation5 + $0x18] sm:$0xff]
    %v43 = vld [vmem:[#allocation5 + $0x20] sm:$0xff]
    %v44 = vld [vmem:[#allocation5 + $0x28] sm:$0xff]
    %v45 = vld [vmem:[#allocation5 + $0x30] sm:$0xff]
    %v46 = vld [vmem:[#allocation5 + $0x38] sm:$0xff]
    %vm47 = vcmask 523264
    %v49 = vsel %vm47, %v38, 0
    %51 = vmatprep.subr.mxu0 0.0
    %52 = vmatpush1.msra.mxu0 0.0
    %53 = vmatprep.subr.mxu0 0.0
    %54 = vmatpush1.msra.mxu0 0.0
    %55 = vmatprep.subr.mxu0 0.0
    %56 = vmatpush1.msra.mxu0 0.0
    %57 = vmatprep.subr.mxu0 0.0
    %58 = vmatpush1.msra.mxu0 0.0
    %59 = vmatprep.subr.mxu0 0.0
    %60 = vmatpush1.msra.mxu0 0.0
    %61 = vmatprep.subr.mxu0 0.0
    %62 = vmatpush1.msra.mxu0 0.0
    %63 = vmatprep.subr.mxu0 0.0
    %64 = vmatpush1.msra.mxu0 0.0
    %65 = vmatprep.subr.mxu0 0.0
    %66 = vmatpush1.msra.mxu0 0.0
    %67 = vmatprep.subr.mxu0 0.0
    %68 = vmatpush1.msra.mxu0 %v46
    %69 = vmatprep.subr.mxu0 0.0
    %70 = vmatpush1.msra.mxu0 %v45
    %71 = vmatprep.subr.mxu0 0.0
    %72 = vmatpush1.msra.mxu0 %v44
    %73 = vmatprep.subr.mxu0 0.0
    %74 = vmatpush1.msra.mxu0 %v43
    %75 = vmatprep.subr.mxu0 0.0
    %76 = vmatpush1.msra.mxu0 %v42
    %77 = vmatprep.subr.mxu0 0.0
    %78 = vmatpush1.msra.mxu0 %v41
    %79 = vmatprep.subr.mxu0 0.0
    %80 = vmatpush1.msra.mxu0 %v40
    %81 = vmatprep.subr.mxu0 0.0
    %82 = vmatpush1.msra.mxu0 %v39
    %83 = vmatprep.subr.mxu0 0.0
    %84 = vmatpush2.msra.mxu0 0.0
    %85 = vmatprep.subr.mxu0 0.0
    %86 = vmatpush2.msra.mxu0 0.0
    %87 = vmatprep.subr.mxu0 0.0
    %88 = vmatpush2.msra.mxu0 0.0
    %89 = vmatprep.subr.mxu0 0.0
    %90 = vmatpush2.msra.mxu0 0.0
    %91 = vmatprep.subr.mxu0 0.0
    %92 = vmatpush2.msra.mxu0 0.0
    %93 = vmatprep.subr.mxu0 0.0
    %94 = vmatpush2.msra.mxu0 0.0
    %95 = vmatprep.subr.mxu0 0.0
    %96 = vmatpush2.msra.mxu0 0.0
    %97 = vmatprep.subr.mxu0 0.0
    %98 = vmatpush2.msra.mxu0 0.0
    %99 = vmatprep.subr.mxu0 0.0
    %100 = vmatpush2.msra.mxu0 0.0
    %101 = vmatprep.subr.mxu0 0.0
    %102 = vmatpush2.msra.mxu0 0.0
    %103 = vmatprep.subr.mxu0 0.0
    %104 = vmatpush2.msra.mxu0 0.0
    %105 = vmatprep.subr.mxu0 0.0
    %106 = vmatpush2.msra.mxu0 0.0
    %107 = vmatprep.subr.mxu0 0.0
    %108 = vmatpush2.msra.mxu0 0.0
    %109 = vmatprep.subr.mxu0 0.0
    %110 = vmatpush2.msra.mxu0 0.0
    %111 = vmatprep.subr.mxu0 0.0
    %112 = vmatpush2.msra.mxu0 0.0
    %113 = vmatprep.subr.mxu0 0.0
    %114 = vmatpush2.msra.mxu0 0.0
    %115 = vmatprep.mubr.f32.mxu0 0.0
    %116 = vmatmul.mubr.f32.gmra.mxu0 %v49
    %v117 = vpop.f32.mrf.mxu0
    %v118 = vadd.f32 0.0, %v117
    %v119 = vpop.f32.mrf.mxu0
    %120 = vdwg.mxu0
    %121 = vst.msk [vmem:[#allocation7] sm:$0xff] %vm47, %v118
    // Predicated region
    $region18: #{tpu_custom_call.1} parent=1 // pred_check
      _
    $region19: #{tpu_custom_call.1} parent=1 // pred_check_branch
      %123 = sbr.rel (0) target = $region21
    $region20: #{tpu_custom_call.1} parent=1 // pred_region
      %s125 = ssub.s32 128, 128
      %126 = vsyncadd [#allocation4], %s125
      %s128 = sshll.u32 [#allocation7], 4
      %s129 = int_to_ptr.vmem [resolvable:$true] %s128
      %131 = dma.vmem_to_hbm [thread:$0]  %s129, 128, %s2, [#allocation4]
    $region21: #{tpu_custom_call.1} parent=1 // pred_fallthru
      _
    // Predicated region
    $region22: #{tpu_custom_call.1} parent=1 // pred_check
      _
    $region23: #{tpu_custom_call.1} parent=1 // pred_check_branch
      %133 = sbr.rel (0) target = $region25
    $region24: #{tpu_custom_call.1} parent=1 // pred_region
      %134 = dma.done [#allocation4], 128
    $region25: #{tpu_custom_call.1} parent=1 // pred_fallthru
      _
    %135 = vsyncpa [#allocation3], 1
    %136 = vsyncpa [#allocation6], 1
    %137 = vsyncpa [#allocation4], 1

</llo_original>
